<compile_context>
chip_gen: v7x
topology: tpu7x:2x2x1
jax: 0.10.0
libtpu: 0.0.40
codegen_flags: <defaults>
</compile_context>

<pallas_src>
import functools

import jax
import jax.numpy as jnp
from jax.experimental import pallas as pl
from jax.experimental.pallas import tpu as pltpu


def _double_conv_kernel(x_ref, w1_ref, b1_ref, w2_ref, b2_ref, sel_ref, o_ref,
                        p1_ref, p2_ref, *, W, KH, KW, pool, nb):
    """One grid step: `nb` images, each processed fully in VMEM.

    x_ref  : (nb, Cin, H*W)     flat NCHW images
    w1_ref : (C1, KH*KW*Cin)    conv1 weights, contraction ordered (kh, kw, ci)
    b1_ref : (C1, 1)
    w2_ref : (C2, KH*KW*C1)
    b2_ref : (C2, 1)
    sel_ref: (Lm, Hp*Wp)        0/1 pool-position selection matrix
    o_ref  : (nb, C2, Hp*Wp)
    p1_ref : (KH*KW*Cin, L1)    VMEM scratch for conv1 im2col patches
    p2_ref : (KH*KW*C1,  L2)    VMEM scratch for conv2 im2col patches
    """
    w1 = w1_ref[...]
    w2 = w2_ref[...]
    b1 = b1_ref[...]
    b2 = b2_ref[...]
    sel = sel_ref[...]
    Lm = sel.shape[0]

    def conv_relu(inp, patch_ref, wmat, bias):
        # inp: (cin, >= length + (KH-1)*W + KW-1) flat activations.
        # Row (kh*KW + kw)*cin + ci of the patch matrix is inp[ci] shifted
        # left by kh*W + kw lanes (unit-stride lane slice, no relayout).
        cin = inp.shape[0]
        length = patch_ref.shape[1]
        for kh in range(KH):
            for kw in range(KW):
                t = kh * KW + kw
                off = kh * W + kw
                patch_ref[t * cin:(t + 1) * cin, :] = inp[:, off:off + length]
        acc = jnp.dot(wmat, patch_ref[...],
                      preferred_element_type=jnp.float32)      # (cout, length)
        return jnp.maximum(acc + bias, 0.0)

    for i in range(nb):
        x = x_ref[i].astype(jnp.float32)                       # (Cin, H*W)
        y1 = conv_relu(x, p1_ref, w1, b1)                      # (C1, L1)
        y2 = conv_relu(y1, p2_ref, w2, b2)                     # (C2, L2)

        # Max-pool: running max over the pool*pool lane-shifted copies, so
        # m[:, p] = max of the pool x pool window anchored at flat position p.
        m = y2[:, :Lm]
        for dh in range(pool):
            for dw in range(pool):
                if dh or dw:
                    off = dh * W + dw
                    m = jnp.maximum(m, y2[:, off:off + Lm])
        # One exact 0/1 matmul gathers the pool-strided output positions.
        o_ref[i] = jnp.dot(m, sel,
                           preferred_element_type=jnp.float32
                           ).astype(o_ref.dtype)


def double_conv(x_nchw, w1_hwio, b1, w2_hwio, b2, pool, *, images_per_block=1):
    """x_nchw: (N, Cin, H, W); w*: HWIO (KH, KW, Cin, Cout); b*: (Cout,).

    Returns (N, C2, Hp, Wp): VALID convs + ReLU + floor-mode max-pool,
    identical semantics to the PyTorch module.
    """
    N, Cin, H, W = x_nchw.shape
    KH, KW, _, C1 = w1_hwio.shape
    C2 = w2_hwio.shape[-1]
    H1, W1 = H - KH + 1, W - KW + 1
    H2, W2 = H1 - KH + 1, W1 - KW + 1
    Hp, Wp = H2 // pool, W2 // pool
    S, P = H * W, Hp * Wp

    # Flat-column counts actually needed at each stage.  Downstream stages only
    # read these prefixes, so no zero-padding is ever required and every tap
    # slice stays in bounds (columns past the valid (h, w) range hold junk that
    # is never selected).
    L1 = (H1 - 1) * W + W1                              # conv1 cols read by conv2
    L2 = (pool * Hp - 1) * W + pool * Wp                # conv2 cols read by pool
    Lm = (pool * (Hp - 1)) * W + pool * (Wp - 1) + 1    # pooled-max cols selected

    nb = images_per_block
    assert N % nb == 0, "batch must be divisible by images_per_block"

    # One-time tiny parameter prep: HWIO -> (Cout, KH*KW*Cin) with the
    # contraction dim ordered (kh, kw, ci) to match the kernel's patch layout.
    w1m = jnp.transpose(w1_hwio, (3, 0, 1, 2)).reshape(C1, KH * KW * Cin)
    w2m = jnp.transpose(w2_hwio, (3, 0, 1, 2)).reshape(C2, KH * KW * C1)
    b1c = b1.reshape(C1, 1).astype(jnp.float32)
    b2c = b2.reshape(C2, 1).astype(jnp.float32)

    # 0/1 selection matrix: column j = hp*Wp + wp picks flat position
    # (pool*hp)*W + pool*wp of the pooled-window-max map.
    j = jnp.arange(P)
    tgt = (pool * (j // Wp)) * W + pool * (j % Wp)
    sel = (jnp.arange(Lm)[:, None] == tgt[None, :]).astype(jnp.float32)

    x_flat = x_nchw.reshape(N, Cin, S)        # contiguous: no data movement

    kernel = functools.partial(_double_conv_kernel, W=W, KH=KH, KW=KW,
                               pool=pool, nb=nb)

    out = pl.pallas_call(
        kernel,
        out_shape=jax.ShapeDtypeStruct((N, C2, P), x_nchw.dtype),
        grid=(N // nb,),
        in_specs=[
            pl.BlockSpec((nb, Cin, S), lambda n: (n, 0, 0)),
            pl.BlockSpec((C1, KH * KW * Cin), lambda n: (0, 0)),
            pl.BlockSpec((C1, 1), lambda n: (0, 0)),
            pl.BlockSpec((C2, KH * KW * C1), lambda n: (0, 0)),
            pl.BlockSpec((C2, 1), lambda n: (0, 0)),
            pl.BlockSpec((Lm, P), lambda n: (0, 0)),
        ],
        out_specs=pl.BlockSpec((nb, C2, P), lambda n: (n, 0, 0)),
        scratch_shapes=[
            pltpu.VMEM((KH * KW * Cin, L1), jnp.float32),
            pltpu.VMEM((KH * KW * C1, L2), jnp.float32),
        ],
        compiler_params=pltpu.CompilerParams(
            dimension_semantics=("parallel",),
            vmem_limit_bytes=32 * 1024 * 1024),
    )(x_flat, w1m, b1c, w2m, b2c, sel)

    return out.reshape(N, C2, Hp, Wp)         # contiguous: no data movement


def _reference(x_nchw, w1, b1, w2, b2, pool):
    dn = ("NCHW", "HWIO", "NCHW")
    y = jax.lax.conv_general_dilated(x_nchw, w1, (1, 1), "VALID",
                                     dimension_numbers=dn)
    y = jax.nn.relu(y + b1[None, :, None, None])
    y = jax.lax.conv_general_dilated(y, w2, (1, 1), "VALID",
                                     dimension_numbers=dn)
    y = jax.nn.relu(y + b2[None, :, None, None])
    y = jax.lax.reduce_window(y, -jnp.inf, jax.lax.max,
                              (1, 1, pool, pool), (1, 1, pool, pool), "VALID")
    return y


if __name__ == "__main__":
    # DoubleConv(channels=(4, 8, 8), kernel=3, pool_kernel=2)
    channels = (4, 8, 8)
    ksize = 3
    pool_kernel = 2
    N, H, W = 2, 16, 16

    key = jax.random.PRNGKey(0)
    kx, kw1, kb1, kw2, kb2 = jax.random.split(key, 5)

    x = jax.random.normal(kx, (N, channels[0], H, W), dtype=jnp.float32)
    # deterministic synthetic parameters (Conv2d weights, stored as HWIO)
    w1 = 0.1 * jax.random.normal(kw1, (ksize, ksize, channels[0], channels[1]),
                                 dtype=jnp.float32)
    b1 = 0.1 * jax.random.normal(kb1, (channels[1],), dtype=jnp.float32)
    w2 = 0.1 * jax.random.normal(kw2, (ksize, ksize, channels[1], channels[2]),
                                 dtype=jnp.float32)
    b2 = 0.1 * jax.random.normal(kb2, (channels[2],), dtype=jnp.float32)

    out = double_conv(x, w1, b1, w2, b2, pool_kernel)
    out = jax.block_until_ready(out)

    ref = jax.block_until_ready(_reference(x, w1, b1, w2, b2, pool_kernel))
    assert out.shape == ref.shape, (out.shape, ref.shape)
    assert jnp.allclose(out, ref, atol=1e-4, rtol=1e-4), "mismatch vs reference"

    print("KERNEL_OK")
</pallas_src>

<mosaic_0001>
module attributes {stable_mosaic.version = 11 : i64} {
  func.func @_double_conv_kernel(%arg0: i32, %arg1: memref<1x4x256xf32, #tpu.memory_space<vmem>>, %arg2: memref<8x36xf32, #tpu.memory_space<vmem>>, %arg3: memref<8x1xf32, #tpu.memory_space<vmem>>, %arg4: memref<8x72xf32, #tpu.memory_space<vmem>>, %arg5: memref<8x1xf32, #tpu.memory_space<vmem>>, %arg6: memref<171x36xf32, #tpu.memory_space<vmem>>, %arg7: memref<1x8x36xf32, #tpu.memory_space<vmem>>, %arg8: memref<36x222xf32, #tpu.memory_space<vmem>>, %arg9: memref<72x188xf32, #tpu.memory_space<vmem>>) attributes {dimension_semantics = [#tpu.dimension_semantics<parallel>], iteration_bounds = array<i64: 2>, scalar_prefetch = 0 : i64, scratch_operands = 2 : i64, tpu.core_type = #tpu.core_type<tc>, window_params = [{transform_indices = @transform_0, window_bounds = array<i64: 1, 4, 256>}, {pipeline_mode = #tpu.pipeline_mode<synchronous>, transform_indices = @transform_1, window_bounds = array<i64: 8, 36>}, {pipeline_mode = #tpu.pipeline_mode<synchronous>, transform_indices = @transform_2, window_bounds = array<i64: 8, 1>}, {pipeline_mode = #tpu.pipeline_mode<synchronous>, transform_indices = @transform_3, window_bounds = array<i64: 8, 72>}, {pipeline_mode = #tpu.pipeline_mode<synchronous>, transform_indices = @transform_4, window_bounds = array<i64: 8, 1>}, {pipeline_mode = #tpu.pipeline_mode<synchronous>, transform_indices = @transform_5, window_bounds = array<i64: 171, 36>}, {transform_indices = @transform_6, window_bounds = array<i64: 1, 8, 36>}]} {
    %c0 = arith.constant 0 : index
    %c0_0 = arith.constant 0 : index
    %0 = vector.load %arg2[%c0, %c0_0] : memref<8x36xf32, #tpu.memory_space<vmem>>, vector<8x36xf32>
    %c0_1 = arith.constant 0 : index
    %c0_2 = arith.constant 0 : index
    %1 = vector.load %arg4[%c0_1, %c0_2] : memref<8x72xf32, #tpu.memory_space<vmem>>, vector<8x72xf32>
    %c0_3 = arith.constant 0 : index
    %c0_4 = arith.constant 0 : index
    %2 = vector.load %arg3[%c0_3, %c0_4] : memref<8x1xf32, #tpu.memory_space<vmem>>, vector<8x1xf32>
    %c0_5 = arith.constant 0 : index
    %c0_6 = arith.constant 0 : index
    %3 = vector.load %arg5[%c0_5, %c0_6] : memref<8x1xf32, #tpu.memory_space<vmem>>, vector<8x1xf32>
    %c0_7 = arith.constant 0 : index
    %c0_8 = arith.constant 0 : index
    %4 = vector.load %arg6[%c0_7, %c0_8] : memref<171x36xf32, #tpu.memory_space<vmem>>, vector<171x36xf32>
    %c0_9 = arith.constant 0 : index
    %c0_10 = arith.constant 0 : index
    %c0_11 = arith.constant 0 : index
    %5 = vector.load %arg1[%c0_9, %c0_10, %c0_11] : memref<1x4x256xf32, #tpu.memory_space<vmem>>, vector<1x4x256xf32>
    %6 = vector.shape_cast %5 : vector<1x4x256xf32> to vector<4x256xf32>
    %7 = vector.extract_strided_slice %6 {offsets = [0, 0], sizes = [4, 222], strides = [1, 1]} : vector<4x256xf32> to vector<4x222xf32>
    %c0_12 = arith.constant 0 : index
    %c0_13 = arith.constant 0 : index
    %8 = vector.load %arg8[%c0_12, %c0_13] : memref<36x222xf32, #tpu.memory_space<vmem>>, vector<4x222xf32>
    tpu.vector_store %arg8[%c0_12, %c0_13], %7 {strides = array<i32>} : memref<36x222xf32, #tpu.memory_space<vmem>>, vector<4x222xf32>,
    %9 = vector.extract_strided_slice %6 {offsets = [0, 1], sizes = [4, 222], strides = [1, 1]} : vector<4x256xf32> to vector<4x222xf32>
    %c4 = arith.constant 4 : index
    %c0_14 = arith.constant 0 : index
    %10 = vector.load %arg8[%c4, %c0_14] : memref<36x222xf32, #tpu.memory_space<vmem>>, vector<4x222xf32>
    tpu.vector_store %arg8[%c4, %c0_14], %9 {strides = array<i32>} : memref<36x222xf32, #tpu.memory_space<vmem>>, vector<4x222xf32>,
    %11 = vector.extract_strided_slice %6 {offsets = [0, 2], sizes = [4, 222], strides = [1, 1]} : vector<4x256xf32> to vector<4x222xf32>
    %c8 = arith.constant 8 : index
    %c0_15 = arith.constant 0 : index
    %12 = vector.load %arg8[%c8, %c0_15] : memref<36x222xf32, #tpu.memory_space<vmem>>, vector<4x222xf32>
    tpu.vector_store %arg8[%c8, %c0_15], %11 {strides = array<i32>} : memref<36x222xf32, #tpu.memory_space<vmem>>, vector<4x222xf32>,
    %13 = vector.extract_strided_slice %6 {offsets = [0, 16], sizes = [4, 222], strides = [1, 1]} : vector<4x256xf32> to vector<4x222xf32>
    %c12 = arith.constant 12 : index
    %c0_16 = arith.constant 0 : index
    %14 = vector.load %arg8[%c12, %c0_16] : memref<36x222xf32, #tpu.memory_space<vmem>>, vector<4x222xf32>
    tpu.vector_store %arg8[%c12, %c0_16], %13 {strides = array<i32>} : memref<36x222xf32, #tpu.memory_space<vmem>>, vector<4x222xf32>,
    %15 = vector.extract_strided_slice %6 {offsets = [0, 17], sizes = [4, 222], strides = [1, 1]} : vector<4x256xf32> to vector<4x222xf32>
    %c16 = arith.constant 16 : index
    %c0_17 = arith.constant 0 : index
    %16 = vector.load %arg8[%c16, %c0_17] : memref<36x222xf32, #tpu.memory_space<vmem>>, vector<4x222xf32>
    tpu.vector_store %arg8[%c16, %c0_17], %15 {strides = array<i32>} : memref<36x222xf32, #tpu.memory_space<vmem>>, vector<4x222xf32>,
    %17 = vector.extract_strided_slice %6 {offsets = [0, 18], sizes = [4, 222], strides = [1, 1]} : vector<4x256xf32> to vector<4x222xf32>
    %c20 = arith.constant 20 : index
    %c0_18 = arith.constant 0 : index
    %18 = vector.load %arg8[%c20, %c0_18] : memref<36x222xf32, #tpu.memory_space<vmem>>, vector<4x222xf32>
    tpu.vector_store %arg8[%c20, %c0_18], %17 {strides = array<i32>} : memref<36x222xf32, #tpu.memory_space<vmem>>, vector<4x222xf32>,
    %19 = vector.extract_strided_slice %6 {offsets = [0, 32], sizes = [4, 222], strides = [1, 1]} : vector<4x256xf32> to vector<4x222xf32>
    %c24 = arith.constant 24 : index
    %c0_19 = arith.constant 0 : index
    %20 = vector.load %arg8[%c24, %c0_19] : memref<36x222xf32, #tpu.memory_space<vmem>>, vector<4x222xf32>
    tpu.vector_store %arg8[%c24, %c0_19], %19 {strides = array<i32>} : memref<36x222xf32, #tpu.memory_space<vmem>>, vector<4x222xf32>,
    %21 = vector.extract_strided_slice %6 {offsets = [0, 33], sizes = [4, 222], strides = [1, 1]} : vector<4x256xf32> to vector<4x222xf32>
    %c28 = arith.constant 28 : index
    %c0_20 = arith.constant 0 : index
    %22 = vector.load %arg8[%c28, %c0_20] : memref<36x222xf32, #tpu.memory_space<vmem>>, vector<4x222xf32>
    tpu.vector_store %arg8[%c28, %c0_20], %21 {strides = array<i32>} : memref<36x222xf32, #tpu.memory_space<vmem>>, vector<4x222xf32>,
    %23 = vector.extract_strided_slice %6 {offsets = [0, 34], sizes = [4, 222], strides = [1, 1]} : vector<4x256xf32> to vector<4x222xf32>
    %c32 = arith.constant 32 : index
    %c0_21 = arith.constant 0 : index
    %24 = vector.load %arg8[%c32, %c0_21] : memref<36x222xf32, #tpu.memory_space<vmem>>, vector<4x222xf32>
    tpu.vector_store %arg8[%c32, %c0_21], %23 {strides = array<i32>} : memref<36x222xf32, #tpu.memory_space<vmem>>, vector<4x222xf32>,
    %c0_22 = arith.constant 0 : index
    %c0_23 = arith.constant 0 : index
    %25 = vector.load %arg8[%c0_22, %c0_23] : memref<36x222xf32, #tpu.memory_space<vmem>>, vector<36x222xf32>
    %cst = arith.constant dense<0.000000e+00> : vector<8x222xf32>
    %26 = tpu.matmul %0, %25, %cst {dimension_numbers = #tpu.dot_dimension_numbers<[1], [0], [0], [1], [0, 0, 1, 1], [], []>} : vector<8x36xf32>, vector<36x222xf32>, vector<8x222xf32> -> vector<8x222xf32>
    %27 = vector.broadcast %2 : vector<8x1xf32> to vector<8x222xf32>
    %28 = arith.addf %26, %27 : vector<8x222xf32>
    %cst_24 = arith.constant 0.000000e+00 : f32
    %29 = vector.broadcast %cst_24 : f32 to vector<8x222xf32>
    %30 = arith.maximumf %28, %29 : vector<8x222xf32>
    %31 = vector.extract_strided_slice %30 {offsets = [0, 0], sizes = [8, 188], strides = [1, 1]} : vector<8x222xf32> to vector<8x188xf32>
    %c0_25 = arith.constant 0 : index
    %c0_26 = arith.constant 0 : index
    %32 = vector.load %arg9[%c0_25, %c0_26] : memref<72x188xf32, #tpu.memory_space<vmem>>, vector<8x188xf32>
    tpu.vector_store %arg9[%c0_25, %c0_26], %31 {strides = array<i32>} : memref<72x188xf32, #tpu.memory_space<vmem>>, vector<8x188xf32>,
    %33 = vector.extract_strided_slice %30 {offsets = [0, 1], sizes = [8, 188], strides = [1, 1]} : vector<8x222xf32> to vector<8x188xf32>
    %c8_27 = arith.constant 8 : index
    %c0_28 = arith.constant 0 : index
    %34 = vector.load %arg9[%c8_27, %c0_28] : memref<72x188xf32, #tpu.memory_space<vmem>>, vector<8x188xf32>
    tpu.vector_store %arg9[%c8_27, %c0_28], %33 {strides = array<i32>} : memref<72x188xf32, #tpu.memory_space<vmem>>, vector<8x188xf32>,
    %35 = vector.extract_strided_slice %30 {offsets = [0, 2], sizes = [8, 188], strides = [1, 1]} : vector<8x222xf32> to vector<8x188xf32>
    %c16_29 = arith.constant 16 : index
    %c0_30 = arith.constant 0 : index
    %36 = vector.load %arg9[%c16_29, %c0_30] : memref<72x188xf32, #tpu.memory_space<vmem>>, vector<8x188xf32>
    tpu.vector_store %arg9[%c16_29, %c0_30], %35 {strides = array<i32>} : memref<72x188xf32, #tpu.memory_space<vmem>>, vector<8x188xf32>,
    %37 = vector.extract_strided_slice %30 {offsets = [0, 16], sizes = [8, 188], strides = [1, 1]} : vector<8x222xf32> to vector<8x188xf32>
    %c24_31 = arith.constant 24 : index
    %c0_32 = arith.constant 0 : index
    %38 = vector.load %arg9[%c24_31, %c0_32] : memref<72x188xf32, #tpu.memory_space<vmem>>, vector<8x188xf32>
    tpu.vector_store %arg9[%c24_31, %c0_32], %37 {strides = array<i32>} : memref<72x188xf32, #tpu.memory_space<vmem>>, vector<8x188xf32>,
    %39 = vector.extract_strided_slice %30 {offsets = [0, 17], sizes = [8, 188], strides = [1, 1]} : vector<8x222xf32> to vector<8x188xf32>
    %c32_33 = arith.constant 32 : index
    %c0_34 = arith.constant 0 : index
    %40 = vector.load %arg9[%c32_33, %c0_34] : memref<72x188xf32, #tpu.memory_space<vmem>>, vector<8x188xf32>
    tpu.vector_store %arg9[%c32_33, %c0_34], %39 {strides = array<i32>} : memref<72x188xf32, #tpu.memory_space<vmem>>, vector<8x188xf32>,
    %41 = vector.extract_strided_slice %30 {offsets = [0, 18], sizes = [8, 188], strides = [1, 1]} : vector<8x222xf32> to vector<8x188xf32>
    %c40 = arith.constant 40 : index
    %c0_35 = arith.constant 0 : index
    %42 = vector.load %arg9[%c40, %c0_35] : memref<72x188xf32, #tpu.memory_space<vmem>>, vector<8x188xf32>
    tpu.vector_store %arg9[%c40, %c0_35], %41 {strides = array<i32>} : memref<72x188xf32, #tpu.memory_space<vmem>>, vector<8x188xf32>,
    %43 = vector.extract_strided_slice %30 {offsets = [0, 32], sizes = [8, 188], strides = [1, 1]} : vector<8x222xf32> to vector<8x188xf32>
    %c48 = arith.constant 48 : index
    %c0_36 = arith.constant 0 : index
    %44 = vector.load %arg9[%c48, %c0_36] : memref<72x188xf32, #tpu.memory_space<vmem>>, vector<8x188xf32>
    tpu.vector_store %arg9[%c48, %c0_36], %43 {strides = array<i32>} : memref<72x188xf32, #tpu.memory_space<vmem>>, vector<8x188xf32>,
    %45 = vector.extract_strided_slice %30 {offsets = [0, 33], sizes = [8, 188], strides = [1, 1]} : vector<8x222xf32> to vector<8x188xf32>
    %c56 = arith.constant 56 : index
    %c0_37 = arith.constant 0 : index
    %46 = vector.load %arg9[%c56, %c0_37] : memref<72x188xf32, #tpu.memory_space<vmem>>, vector<8x188xf32>
    tpu.vector_store %arg9[%c56, %c0_37], %45 {strides = array<i32>} : memref<72x188xf32, #tpu.memory_space<vmem>>, vector<8x188xf32>,
    %47 = vector.extract_strided_slice %30 {offsets = [0, 34], sizes = [8, 188], strides = [1, 1]} : vector<8x222xf32> to vector<8x188xf32>
    %c64 = arith.constant 64 : index
    %c0_38 = arith.constant 0 : index
    %48 = vector.load %arg9[%c64, %c0_38] : memref<72x188xf32, #tpu.memory_space<vmem>>, vector<8x188xf32>
    tpu.vector_store %arg9[%c64, %c0_38], %47 {strides = array<i32>} : memref<72x188xf32, #tpu.memory_space<vmem>>, vector<8x188xf32>,
    %c0_39 = arith.constant 0 : index
    %c0_40 = arith.constant 0 : index
    %49 = vector.load %arg9[%c0_39, %c0_40] : memref<72x188xf32, #tpu.memory_space<vmem>>, vector<72x188xf32>
    %cst_41 = arith.constant dense<0.000000e+00> : vector<8x188xf32>
    %50 = tpu.matmul %1, %49, %cst_41 {dimension_numbers = #tpu.dot_dimension_numbers<[1], [0], [0], [1], [0, 0, 1, 1], [], []>} : vector<8x72xf32>, vector<72x188xf32>, vector<8x188xf32> -> vector<8x188xf32>
    %51 = vector.broadcast %3 : vector<8x1xf32> to vector<8x188xf32>
    %52 = arith.addf %50, %51 : vector<8x188xf32>
    %cst_42 = arith.constant 0.000000e+00 : f32
    %53 = vector.broadcast %cst_42 : f32 to vector<8x188xf32>
    %54 = arith.maximumf %52, %53 : vector<8x188xf32>
    %55 = vector.extract_strided_slice %54 {offsets = [0, 0], sizes = [8, 171], strides = [1, 1]} : vector<8x188xf32> to vector<8x171xf32>
    %56 = vector.extract_strided_slice %54 {offsets = [0, 1], sizes = [8, 171], strides = [1, 1]} : vector<8x188xf32> to vector<8x171xf32>
    %57 = arith.maximumf %55, %56 : vector<8x171xf32>
    %58 = vector.extract_strided_slice %54 {offsets = [0, 16], sizes = [8, 171], strides = [1, 1]} : vector<8x188xf32> to vector<8x171xf32>
    %59 = arith.maximumf %57, %58 : vector<8x171xf32>
    %60 = vector.extract_strided_slice %54 {offsets = [0, 17], sizes = [8, 171], strides = [1, 1]} : vector<8x188xf32> to vector<8x171xf32>
    %61 = arith.maximumf %59, %60 : vector<8x171xf32>
    %cst_43 = arith.constant dense<0.000000e+00> : vector<8x36xf32>
    %62 = tpu.matmul %61, %4, %cst_43 {dimension_numbers = #tpu.dot_dimension_numbers<[1], [0], [0], [1], [0, 0, 1, 1], [], []>} : vector<8x171xf32>, vector<171x36xf32>, vector<8x36xf32> -> vector<8x36xf32>
    %c0_44 = arith.constant 0 : index
    %c0_45 = arith.constant 0 : index
    %c0_46 = arith.constant 0 : index
    %63 = vector.load %arg7[%c0_44, %c0_45, %c0_46] : memref<1x8x36xf32, #tpu.memory_space<vmem>>, vector<1x8x36xf32>
    %64 = vector.shape_cast %63 : vector<1x8x36xf32> to vector<8x36xf32>
    %65 = vector.shape_cast %62 : vector<8x36xf32> to vector<1x8x36xf32>
    tpu.vector_store %arg7[%c0_44, %c0_45, %c0_46], %65 {strides = array<i32>} : memref<1x8x36xf32, #tpu.memory_space<vmem>>, vector<1x8x36xf32>,
    return
  }
  func.func @transform_0(%arg0: i32) -> (i32, i32, i32) {
    %c0_i32 = arith.constant 0 : i32
    %c0_i32_0 = arith.constant 0 : i32
    %c0_i32_1 = arith.constant 0 : i32
    return %arg0, %c0_i32, %c0_i32_0 : i32, i32, i32
  }
  func.func @transform_1(%arg0: i32) -> (i32, i32) {
    %c0_i32 = arith.constant 0 : i32
    %c0_i32_0 = arith.constant 0 : i32
    %c0_i32_1 = arith.constant 0 : i32
    return %c0_i32, %c0_i32_0 : i32, i32
  }
  func.func @transform_2(%arg0: i32) -> (i32, i32) {
    %c0_i32 = arith.constant 0 : i32
    %c0_i32_0 = arith.constant 0 : i32
    %c0_i32_1 = arith.constant 0 : i32
    return %c0_i32, %c0_i32_0 : i32, i32
  }
  func.func @transform_3(%arg0: i32) -> (i32, i32) {
    %c0_i32 = arith.constant 0 : i32
    %c0_i32_0 = arith.constant 0 : i32
    %c0_i32_1 = arith.constant 0 : i32
    return %c0_i32, %c0_i32_0 : i32, i32
  }
  func.func @transform_4(%arg0: i32) -> (i32, i32) {
    %c0_i32 = arith.constant 0 : i32
    %c0_i32_0 = arith.constant 0 : i32
    %c0_i32_1 = arith.constant 0 : i32
    return %c0_i32, %c0_i32_0 : i32, i32
  }
  func.func @transform_5(%arg0: i32) -> (i32, i32) {
    %c0_i32 = arith.constant 0 : i32
    %c0_i32_0 = arith.constant 0 : i32
    %c0_i32_1 = arith.constant 0 : i32
    return %c0_i32, %c0_i32_0 : i32, i32
  }
  func.func @transform_6(%arg0: i32) -> (i32, i32, i32) {
    %c0_i32 = arith.constant 0 : i32
    %c0_i32_0 = arith.constant 0 : i32
    %c0_i32_1 = arith.constant 0 : i32
    return %arg0, %c0_i32, %c0_i32_0 : i32, i32, i32
  }
}

</mosaic_0001>

<llo_original>
// kernel: tpu_custom_call.1
$region0: #{tpu_custom_call.1}
  #allocation0 [shape = 'u32[]', space=smem, size = 0x4, offset = 0x4, fixed_abs, tag = 'smem constant byte address 0x4 - core index']
  #allocation1 [shape = 'u32[144,128]{1,0:T(1,128)}', space=vmem, size = 0x12000, scoped, tag = 'internal scratch']
  #allocation2 [shape = 'f32[36,222]{1,0:T(8,128)}', space=vmem, size = 0xa000, scoped, tag = 'scratch operand']
  #allocation3 [shape = 'f32[72,188]{1,0:T(8,128)}', space=vmem, size = 0x12000, scoped, tag = 'scratch operand']
  %s0 = inlined_call_operand.vmem [shape: f32[2,4,256], index: 0, kind: input, shape index: {}]
  %s1 = inlined_call_operand.vmem [shape: f32[8,36], index: 1, kind: input, shape index: {}]
  %s2 = inlined_call_operand.vmem [shape: f32[8,1], index: 2, kind: input, shape index: {}]
  %s3 = inlined_call_operand.vmem [shape: f32[8,72], index: 3, kind: input, shape index: {}]
  %s4 = inlined_call_operand.vmem [shape: f32[8,1], index: 4, kind: input, shape index: {}]
  %s5 = inlined_call_operand.vmem [shape: f32[171,36], index: 5, kind: input, shape index: {}]
  %s6 = inlined_call_operand.hbm [shape: f32[2,8,36], index: 6, kind: output, shape index: {}]
  %s7 = sld [smem:[#allocation0]]
  $region57: #{tpu_custom_call.1} parent=0
    _
  %s9 = ssub.s32 1, %s7
  %s10 = scalar_select 0, %s9, %s7
  $region1: #{tpu_custom_call.1} parent=0
    #allocation4 [shape = 'u8[8192]{0}', space=vmem, size = 0x2000, scoped, tag = 'output window, operand 0']
    #allocation5 [shape = 's32[2]{0}', space=sflag, size = 0x8, scoped, tag = 'scoped memory for tpu_custom_call.1']
    %11 = vsyncpa [#allocation5], 0
    %s12 = scalar_lea.sflag [#allocation5], 1
    %13 = vsyncpa %s12, 0
    loop: start=0, step=1, limit=4
    $region2: #{tpu_custom_call.1} parent=1 // loop_pre_header
      _
    $region3: #{tpu_custom_call.1} parent=1 // loop_header
      %s15 = sphi 0, %s19
      %p16 = scmp.ge.s32.totalorder %s15, 4
      %s25 = sphi 0, %s27
      %s28 = sphi 0, %s25
      %s29 = sphi 0, %s28
      %s45 = sphi 0, %s29
      %s49 = sphi 0, %s49
      %s51 = sphi 0, %s49
      %s52 = sphi 0, %s51
      %s66 = sphi 0, %s52
      %s70 = sphi 0, %s70
      %s72 = sphi 0, %s70
      %s73 = sphi 0, %s72
      %s87 = sphi 0, %s73
      %s91 = sphi 0, %s91
      %s93 = sphi 0, %s91
      %s94 = sphi 0, %s93
      %s108 = sphi 0, %s94
      %s112 = sphi 0, %s112
      %s114 = sphi 0, %s112
      %s115 = sphi 0, %s114
      %s129 = sphi 0, %s115
      %s133 = sphi 0, %s133
      %s135 = sphi 0, %s133
      %s136 = sphi 0, %s135
      %s150 = sphi 0, %s136
      %s156 = sphi 0, %s158
      %s159 = sphi 0, %s156
      %s160 = sphi 0, %s159
      %s176 = sphi 0, %s160
    $region4: #{tpu_custom_call.1} parent=1 // loop_header_branch
      %18 = sbr.rel (%p16) target = $region8
    $region5: #{tpu_custom_call.1} parent=1 // loop_body
      %s20 = ssub.s32 %s15, 1
      %s21 = ssub.s32 %s15, 2
      %s22 = sadd.s32 %s15, 1
      %s23 = ssub.s32 %s15, %s22
      %p24 = scmp.eq.s32.totalorder %s23, 0
      %s26 = sadd.s32 %s25, 1
      %s27 = scalar_select %p24, %s25, %s26
      %p30 = pneg %p24
      %p31 = scmp.eq.s32.totalorder %s15, 1
      %p32 = por %p30, %p31
      %p33 = scmp.ne.s32.totalorder %s25, %s28
      %p34 = scmp.eq.s32.totalorder %s15, 0
      %p35 = por %p33, %p34
      %p36 = scmp.ne.s32.totalorder %s25, %s28
      %p37 = scmp.eq.s32.totalorder %s20, 1
      %p38 = por %p36, %p37
      %p39 = scmp.ne.s32.totalorder %s28, %s29
      %p40 = scmp.eq.s32.totalorder %s20, 0
      %p41 = por %p39, %p40
      %p42 = scmp.ne.s32.totalorder %s28, %s29
      %p43 = scmp.eq.s32.totalorder %s21, 1
      %p44 = por %p42, %p43
      %p46 = scmp.ne.s32.totalorder %s29, %s45
      %p47 = scmp.eq.s32.totalorder %s21, 0
      %p48 = por %p46, %p47
      %s50 = sadd.s32 %s49, 1
      %p53 = scmp.eq.s32.totalorder %s15, 1
      %p54 = scmp.ne.s32.totalorder %s49, %s51
      %p55 = scmp.eq.s32.totalorder %s15, 0
      %p56 = por %p54, %p55
      %p57 = scmp.ne.s32.totalorder %s49, %s51
      %p58 = scmp.eq.s32.totalorder %s20, 1
      %p59 = por %p57, %p58
      %p60 = scmp.ne.s32.totalorder %s51, %s52
      %p61 = scmp.eq.s32.totalorder %s20, 0
      %p62 = por %p60, %p61
      %p63 = scmp.ne.s32.totalorder %s51, %s52
      %p64 = scmp.eq.s32.totalorder %s21, 1
      %p65 = por %p63, %p64
      %p67 = scmp.ne.s32.totalorder %s52, %s66
      %p68 = scmp.eq.s32.totalorder %s21, 0
      %p69 = por %p67, %p68
      %s71 = sadd.s32 %s70, 1
      %p74 = scmp.eq.s32.totalorder %s15, 1
      %p75 = scmp.ne.s32.totalorder %s70, %s72
      %p76 = scmp.eq.s32.totalorder %s15, 0
      %p77 = por %p75, %p76
      %p78 = scmp.ne.s32.totalorder %s70, %s72
      %p79 = scmp.eq.s32.totalorder %s20, 1
      %p80 = por %p78, %p79
      %p81 = scmp.ne.s32.totalorder %s72, %s73
      %p82 = scmp.eq.s32.totalorder %s20, 0
      %p83 = por %p81, %p82
      %p84 = scmp.ne.s32.totalorder %s72, %s73
      %p85 = scmp.eq.s32.totalorder %s21, 1
      %p86 = por %p84, %p85
      %p88 = scmp.ne.s32.totalorder %s73, %s87
      %p89 = scmp.eq.s32.totalorder %s21, 0
      %p90 = por %p88, %p89
      %s92 = sadd.s32 %s91, 1
      %p95 = scmp.eq.s32.totalorder %s15, 1
      %p96 = scmp.ne.s32.totalorder %s91, %s93
      %p97 = scmp.eq.s32.totalorder %s15, 0
      %p98 = por %p96, %p97
      %p99 = scmp.ne.s32.totalorder %s91, %s93
      %p100 = scmp.eq.s32.totalorder %s20, 1
      %p101 = por %p99, %p100
      %p102 = scmp.ne.s32.totalorder %s93, %s94
      %p103 = scmp.eq.s32.totalorder %s20, 0
      %p104 = por %p102, %p103
      %p105 = scmp.ne.s32.totalorder %s93, %s94
      %p106 = scmp.eq.s32.totalorder %s21, 1
      %p107 = por %p105, %p106
      %p109 = scmp.ne.s32.totalorder %s94, %s108
      %p110 = scmp.eq.s32.totalorder %s21, 0
      %p111 = por %p109, %p110
      %s113 = sadd.s32 %s112, 1
      %p116 = scmp.eq.s32.totalorder %s15, 1
      %p117 = scmp.ne.s32.totalorder %s112, %s114
      %p118 = scmp.eq.s32.totalorder %s15, 0
      %p119 = por %p117, %p118
      %p120 = scmp.ne.s32.totalorder %s112, %s114
      %p121 = scmp.eq.s32.totalorder %s20, 1
      %p122 = por %p120, %p121
      %p123 = scmp.ne.s32.totalorder %s114, %s115
      %p124 = scmp.eq.s32.totalorder %s20, 0
      %p125 = por %p123, %p124
      %p126 = scmp.ne.s32.totalorder %s114, %s115
      %p127 = scmp.eq.s32.totalorder %s21, 1
      %p128 = por %p126, %p127
      %p130 = scmp.ne.s32.totalorder %s115, %s129
      %p131 = scmp.eq.s32.totalorder %s21, 0
      %p132 = por %p130, %p131
      %s134 = sadd.s32 %s133, 1
      %p137 = scmp.eq.s32.totalorder %s15, 1
      %p138 = scmp.ne.s32.totalorder %s133, %s135
      %p139 = scmp.eq.s32.totalorder %s15, 0
      %p140 = por %p138, %p139
      %p141 = scmp.ne.s32.totalorder %s133, %s135
      %p142 = scmp.eq.s32.totalorder %s20, 1
      %p143 = por %p141, %p142
      %p144 = scmp.ne.s32.totalorder %s135, %s136
      %p145 = scmp.eq.s32.totalorder %s20, 0
      %p146 = por %p144, %p145
      %p147 = scmp.ne.s32.totalorder %s135, %s136
      %p148 = scmp.eq.s32.totalorder %s21, 1
      %p149 = por %p147, %p148
      %p151 = scmp.ne.s32.totalorder %s136, %s150
      %p152 = scmp.eq.s32.totalorder %s21, 0
      %p153 = por %p151, %p152
      %s154 = ssub.s32 %s15, %s22
      %p155 = scmp.eq.s32.totalorder %s154, 0
      %s157 = sadd.s32 %s156, 1
      %s158 = scalar_select %p155, %s156, %s157
      %p161 = pneg %p155
      %p162 = scmp.eq.s32.totalorder %s15, 1
      %p163 = por %p161, %p162
      %p164 = scmp.ne.s32.totalorder %s156, %s159
      %p165 = scmp.eq.s32.totalorder %s15, 0
      %p166 = por %p164, %p165
      %p167 = scmp.ne.s32.totalorder %s156, %s159
      %p168 = scmp.eq.s32.totalorder %s20, 1
      %p169 = por %p167, %p168
      %p170 = scmp.ne.s32.totalorder %s159, %s160
      %p171 = scmp.eq.s32.totalorder %s20, 0
      %p172 = por %p170, %p171
      %p173 = scmp.ne.s32.totalorder %s159, %s160
      %p174 = scmp.eq.s32.totalorder %s21, 1
      %p175 = por %p173, %p174
      %p177 = scmp.ne.s32.totalorder %s160, %s176
      %p178 = scmp.eq.s32.totalorder %s21, 0
      %p179 = por %p177, %p178
      %p180 = scmp.le.s32.totalorder 1, %s15
      %p181 = scmp.lt.s32.totalorder %s15, 3
      %p182 = pnand %p180, %p181
      %p183 = pneg %p182
      // Predicated region
      $region9: #{tpu_custom_call.1} parent=5 // pred_check
        _
      $region10: #{tpu_custom_call.1} parent=5 // pred_check_branch
        %185 = sbr.rel (%p182) target = $region12
      $region11: #{tpu_custom_call.1} parent=5 // pred_region
        %s186 = ssub.s32 %s15, 1
        // Predicated region
        $region13: #{tpu_custom_call.1} parent=11 // pred_check
          %p187 = pneg %p62
        $region14: #{tpu_custom_call.1} parent=11 // pred_check_branch
          %189 = sbr.rel (%p187) target = $region16
        $region15: #{tpu_custom_call.1} parent=11 // pred_region
          _
        $region16: #{tpu_custom_call.1} parent=11 // pred_fallthru
          _
        // Predicated region
        $region17: #{tpu_custom_call.1} parent=11 // pred_check
          %p190 = pneg %p83
        $region18: #{tpu_custom_call.1} parent=11 // pred_check_branch
          %192 = sbr.rel (%p190) target = $region20
        $region19: #{tpu_custom_call.1} parent=11 // pred_region
          _
        $region20: #{tpu_custom_call.1} parent=11 // pred_fallthru
          _
        // Predicated region
        $region21: #{tpu_custom_call.1} parent=11 // pred_check
          %p193 = pneg %p104
        $region22: #{tpu_custom_call.1} parent=11 // pred_check_branch
          %195 = sbr.rel (%p193) target = $region24
        $region23: #{tpu_custom_call.1} parent=11 // pred_region
          _
        $region24: #{tpu_custom_call.1} parent=11 // pred_fallthru
          _
        // Predicated region
        $region25: #{tpu_custom_call.1} parent=11 // pred_check
          %p196 = pneg %p125
        $region26: #{tpu_custom_call.1} parent=11 // pred_check_branch
          %198 = sbr.rel (%p196) target = $region28
        $region27: #{tpu_custom_call.1} parent=11 // pred_region
          _
        $region28: #{tpu_custom_call.1} parent=11 // pred_fallthru
          _
        // Predicated region
        $region29: #{tpu_custom_call.1} parent=11 // pred_check
          %p199 = pneg %p146
        $region30: #{tpu_custom_call.1} parent=11 // pred_check_branch
          %201 = sbr.rel (%p199) target = $region32
        $region31: #{tpu_custom_call.1} parent=11 // pred_region
          _
        $region32: #{tpu_custom_call.1} parent=11 // pred_fallthru
          _
      $region12: #{tpu_custom_call.1} parent=5 // pred_fallthru
        _
      %p202 = scmp.lt.s32.totalorder %s15, 2
      // Predicated region
      $region33: #{tpu_custom_call.1} parent=5 // pred_check
        %p203 = pneg %p202
      $region34: #{tpu_custom_call.1} parent=5 // pred_check_branch
        %205 = sbr.rel (%p203) target = $region36
      $region35: #{tpu_custom_call.1} parent=5 // pred_region
        // Predicated region
        $region37: #{tpu_custom_call.1} parent=35 // pred_check
          %p206 = pneg %p35
        $region38: #{tpu_custom_call.1} parent=35 // pred_check_branch
          %208 = sbr.rel (%p206) target = $region40
        $region39: #{tpu_custom_call.1} parent=35 // pred_region
          %p209 = scmp.lt.s32.totalorder %s15, 1
          %s210 = scalar_select %p209, %s15, 1
          %s211 = smul.addr %s210, 2
          %s212 = smul.addr %s211, 4
          %s213 = scalar_lea.vmem %s0, %s212
        $region40: #{tpu_custom_call.1} parent=35 // pred_fallthru
          _
      $region36: #{tpu_custom_call.1} parent=5 // pred_fallthru
        _
      %p214 = scmp.le.s32.totalorder 1, %s15
      %p215 = scmp.lt.s32.totalorder %s15, 3
      %p216 = pnand %p214, %p215
      %p217 = pneg %p216
      // Predicated region
      $region41: #{tpu_custom_call.1} parent=5 // pred_check
        _
      $region42: #{tpu_custom_call.1} parent=5 // pred_check_branch
        %219 = sbr.rel (%p216) target = $region44
      $region43: #{tpu_custom_call.1} parent=5 // pred_region
        %s220 = ssub.s32 %s15, 1
        %p221 = scmp.lt.s32.totalorder %s20, 1
        %s222 = scalar_select %p221, %s20, 1
        %s223 = smul.addr %s222, 2
        %s224 = smul.addr %s223, 4
        %s225 = scalar_lea.vmem %s0, %s224
        %p226 = pneg %p41
        %p227 = pneg %p38
        %p228 = pneg %p62
        %p229 = pneg %p59
        %p230 = pneg %p83
        %p231 = pneg %p80
        %p232 = pneg %p104
        %p233 = pneg %p101
        %p234 = pneg %p125
        %p235 = pneg %p122
        %p236 = pneg %p146
        %p237 = pneg %p143
        %p238 = pneg %p172
        %p239 = pneg %p169
        %s240 = sand.u32 %s159, 1
        %s241 = scalar_lea.sflag [#allocation5], %s240
        %s242 = sand.u32 %s159, 1
        %s243 = smul.addr %s242, 8
        %s244 = scalar_lea.vmem [#allocation4], %s243
        %p245 = scmp.lt.s32.totalorder %s20, 1
        %s246 = scalar_select %p245, %s20, 1
        %s247 = smul.addr %s246, 2
        %s248 = smul.addr %s247, 4
        %s249 = scalar_lea.vmem %s0, %s248
        %v250 = vld [vmem:[%s1] sm:$0xff]
        %v251 = vld [vmem:[%s3] sm:$0xff]
        %v252 = vld [vmem:[%s2] sm:$0xff]
        %v253 = vld [vmem:[%s4] sm:$0xff]
        %v254 = vld [vmem:[%s5] sm:$0xff]
        %v255 = vld [vmem:[%s5 + $0x8] sm:$0xff]
        %v256 = vld [vmem:[%s5 + $0x10] sm:$0xff]
        %v257 = vld [vmem:[%s5 + $0x18] sm:$0xff]
        %v258 = vld [vmem:[%s5 + $0x20] sm:$0xff]
        %v259 = vld [vmem:[%s5 + $0x28] sm:$0xff]
        %v260 = vld [vmem:[%s5 + $0x30] sm:$0xff]
        %v261 = vld [vmem:[%s5 + $0x38] sm:$0xff]
        %v262 = vld [vmem:[%s5 + $0x40] sm:$0xff]
        %v263 = vld [vmem:[%s5 + $0x48] sm:$0xff]
        %v264 = vld [vmem:[%s5 + $0x50] sm:$0xff]
        %v265 = vld [vmem:[%s5 + $0x58] sm:$0xff]
        %v266 = vld [vmem:[%s5 + $0x60] sm:$0xff]
        %v267 = vld [vmem:[%s5 + $0x68] sm:$0xff]
        %v268 = vld [vmem:[%s5 + $0x70] sm:$0xff]
        %v269 = vld [vmem:[%s5 + $0x78] sm:$0xff]
        %v270 = vld [vmem:[%s5 + $0x80] sm:$0xff]
        %v271 = vld [vmem:[%s5 + $0x88] sm:$0xff]
        %v272 = vld [vmem:[%s5 + $0x90] sm:$0xff]
        %v273 = vld [vmem:[%s5 + $0x98] sm:$0xff]
        %v274 = vld [vmem:[%s5 + $0xa0] sm:$0xff]
        %v275 = vld [vmem:[%s5 + $0xa8] sm:$0x7]
        %v276 = vld [vmem:[%s249] sm:$0xff]
        %v278 = vcombine.high %v276, %v276
        %280 = vst [vmem:[#allocation2] sm:$0xf] %v276
        %vm281 = vcmask 764928
        %282 = vst.msk [vmem:[#allocation2 + $0x8] sm:$0xf] %vm281, %v278
        %v283 = vcombine.low %v276, %v276
        %284 = vrot.lane.b32.xlu0 %v283, 127
        %v285 = vpop.permute.xlu0 %284
        %286 = vrot.lane.b32.xlu0 %v276, 127
        %v287 = vpop.permute.xlu0 %286
        %vm288 = vcmask 1039360
        %v289 = vsel %vm288, %v285, %v287
        %292 = vst [vmem:[#allocation2] sm:$0xf0] %v289
        %vm293 = vcmask 769028
        %294 = vst.msk [vmem:[#allocation2 + $0x8] sm:$0xf0] %vm293, %v287
        %295 = vrot.lane.b32.xlu0 %v276, 126
        %v296 = vpop.permute.xlu0 %295
        %297 = vrot.lane.b32.xlu0 %v278, 126
        %v298 = vpop.permute.xlu0 %297
        %vm299 = vcmask 1031168
        %v300 = vsel %vm299, %v296, %v298
        %303 = vst [vmem:[#allocation2 + $0x10] sm:$0xf] %v300
        %304 = vst.msk [vmem:[#allocation2 + $0x18] sm:$0xf] %vm281, %v298
        %305 = vrot.lane.b32.xlu0 %v283, 112
        %v306 = vpop.permute.xlu0 %305
        %307 = vrot.lane.b32.xlu0 %v276, 112
        %v308 = vpop.permute.xlu0 %307
        %vm309 = vcmask 916480
        %v310 = vsel %vm309, %v306, %v308
        %313 = vst [vmem:[#allocation2 + $0x10] sm:$0xf0] %v310
        %314 = vst.msk [vmem:[#allocation2 + $0x18] sm:$0xf0] %vm293, %v308
        %315 = vrot.lane.b32.xlu0 %v276, 111
        %v316 = vpop.permute.xlu0 %315
        %317 = vrot.lane.b32.xlu0 %v278, 111
        %v318 = vpop.permute.xlu0 %317
        %vm319 = vcmask 908288
        %v320 = vsel %vm319, %v316, %v318
        %323 = vst [vmem:[#allocation2 + $0x20] sm:$0xf] %v320
        %324 = vst.msk [vmem:[#allocation2 + $0x28] sm:$0xf] %vm281, %v318
        %325 = vrot.lane.b32.xlu0 %v283, 110
        %v326 = vpop.permute.xlu0 %325
        %327 = vrot.lane.b32.xlu0 %v276, 110
        %v328 = vpop.permute.xlu0 %327
        %vm329 = vcmask 900096
        %v330 = vsel %vm329, %v326, %v328
        %333 = vst [vmem:[#allocation2 + $0x20] sm:$0xf0] %v330
        %334 = vst.msk [vmem:[#allocation2 + $0x28] sm:$0xf0] %vm293, %v328
        %335 = vrot.lane.b32.xlu0 %v276, 96
        %v336 = vpop.permute.xlu0 %335
        %337 = vrot.lane.b32.xlu0 %v278, 96
        %v338 = vpop.permute.xlu0 %337
        %vm339 = vcmask 785408
        %v340 = vsel %vm339, %v336, %v338
        %343 = vst [vmem:[#allocation2 + $0x30] sm:$0xf] %v340
        %344 = vst.msk [vmem:[#allocation2 + $0x38] sm:$0xf] %vm281, %v338
        %345 = vrot.lane.b32.xlu0 %v283, 95
        %v346 = vpop.permute.xlu0 %345
        %347 = vrot.lane.b32.xlu0 %v276, 95
        %v348 = vpop.permute.xlu0 %347
        %vm349 = vcmask 777216
        %v350 = vsel %vm349, %v346, %v348
        %353 = vst [vmem:[#allocation2 + $0x30] sm:$0xf0] %v350
        %354 = vst.msk [vmem:[#allocation2 + $0x38] sm:$0xf0] %vm293, %v348
        %355 = vrot.lane.b32.xlu0 %v276, 94
        %v356 = vpop.permute.xlu0 %355
        %357 = vrot.lane.b32.xlu0 %v278, 94
        %v358 = vpop.permute.xlu0 %357
        %vm359 = vcmask 769024
        %v360 = vsel %vm359, %v356, %v358
        %363 = vst [vmem:[#allocation2 + $0x40] sm:$0xf] %v360
        %364 = vst.msk [vmem:[#allocation2 + $0x48] sm:$0xf] %vm281, %v358
        %v365 = vld [vmem:[#allocation2] sm:$0xff]
        %v366 = vld [vmem:[#allocation2 + $0x8] sm:$0xff]
        %v367 = vld [vmem:[#allocation2 + $0x10] sm:$0xff]
        %v368 = vld [vmem:[#allocation2 + $0x18] sm:$0xff]
        %v369 = vld [vmem:[#allocation2 + $0x20] sm:$0xff]
        %v370 = vld [vmem:[#allocation2 + $0x28] sm:$0xff]
        %v371 = vld [vmem:[#allocation2 + $0x30] sm:$0xff]
        %v372 = vld [vmem:[#allocation2 + $0x38] sm:$0xff]
        %v373 = vld [vmem:[#allocation2 + $0x40] sm:$0xf]
        %v374 = vld [vmem:[#allocation2 + $0x48] sm:$0xf]
        %376 = vset.pattern.permute.xlu0 0
        %377 = vperm.xlu0 %376, %v252
        %v378 = vpop.permute.xlu0 %377
        %vm380 = vcmask 293888
        %v382 = vsel %vm380, %v250, 0
        %vm384 = vcmask 1043456
        %v386 = vsel %vm384, %v373, 0
        %v389 = vsel %vm384, %v374, 0
        %391 = vmatprep.subr.mxu0 %v366
        %392 = vmatpush1.msra.mxu0 %v365
        %393 = vmatprep.subr.mxu0 %v368
        %394 = vmatpush1.msra.mxu0 %v367
        %395 = vmatprep.subr.mxu0 %v370
        %396 = vmatpush1.msra.mxu0 %v369
        %397 = vmatprep.subr.mxu0 %v372
        %398 = vmatpush1.msra.mxu0 %v371
        %399 = vmatprep.subr.mxu0 %v389
        %400 = vmatpush1.msra.mxu0 %v386
        %401 = vmatprep.subr.mxu0 0.0
        %402 = vmatpush1.msra.mxu0 0.0
        %403 = vmatprep.subr.mxu0 0.0
        %404 = vmatpush1.msra.mxu0 0.0
        %405 = vmatprep.subr.mxu0 0.0
        %406 = vmatpush1.msra.mxu0 0.0
        %407 = vmatprep.subr.mxu0 0.0
        %408 = vmatpush1.msra.mxu0 0.0
        %409 = vmatprep.subr.mxu0 0.0
        %410 = vmatpush1.msra.mxu0 0.0
        %411 = vmatprep.subr.mxu0 0.0
        %412 = vmatpush1.msra.mxu0 0.0
        %413 = vmatprep.subr.mxu0 0.0
        %414 = vmatpush1.msra.mxu0 0.0
        %415 = vmatprep.subr.mxu0 0.0
        %416 = vmatpush1.msra.mxu0 0.0
        %417 = vmatprep.subr.mxu0 0.0
        %418 = vmatpush1.msra.mxu0 0.0
        %419 = vmatprep.subr.mxu0 0.0
        %420 = vmatpush1.msra.mxu0 0.0
        %421 = vmatprep.subr.mxu0 0.0
        %422 = vmatpush1.msra.mxu0 0.0
        %423 = vmatprep.subr.mxu0 0.0
        %424 = vmatpush1.msra.mxu0 0.0
        %425 = vmatprep.subr.mxu0 0.0
        %426 = vmatpush1.msra.mxu0 0.0
        %427 = vmatprep.subr.mxu0 0.0
        %428 = vmatpush1.msra.mxu0 0.0
        %429 = vmatprep.subr.mxu0 0.0
        %430 = vmatpush1.msra.mxu0 0.0
        %431 = vmatprep.subr.mxu0 0.0
        %432 = vmatpush1.msra.mxu0 0.0
        %433 = vmatprep.subr.mxu0 0.0
        %434 = vmatpush1.msra.mxu0 0.0
        %435 = vmatprep.subr.mxu0 0.0
        %436 = vmatpush1.msra.mxu0 0.0
        %437 = vmatprep.subr.mxu0 0.0
        %438 = vmatpush1.msra.mxu0 0.0
        %439 = vmatprep.subr.mxu0 0.0
        %440 = vmatpush1.msra.mxu0 0.0
        %441 = vmatprep.subr.mxu0 0.0
        %442 = vmatpush1.msra.mxu0 0.0
        %443 = vmatprep.subr.mxu0 0.0
        %444 = vmatpush1.msra.mxu0 0.0
        %445 = vmatprep.subr.mxu0 0.0
        %446 = vmatpush1.msra.mxu0 0.0
        %447 = vmatprep.subr.mxu0 0.0
        %448 = vmatpush1.msra.mxu0 0.0
        %449 = vmatprep.subr.mxu0 0.0
        %450 = vmatpush1.msra.mxu0 0.0
        %451 = vmatprep.subr.mxu0 0.0
        %452 = vmatpush1.msra.mxu0 0.0
        %453 = vmatprep.subr.mxu0 0.0
        %454 = vmatpush1.msra.mxu0 0.0
        %455 = vmatprep.mubr.f32.mxu0 0.0
        %456 = vmatmul.mubr.f32.gmra.mrb[0].mxu0 %v382
        %v457 = vpop.f32.mrb[0].mxu0
        %v458 = vadd.f32 %v378, %v457
        %v459 = vpop.f32.mrb[0].mxu0
        %v460 = vadd.f32 %v378, %v459
        %461 = vdwg.mxu0
        %v462 = vmax.f32 %v458, 0.0
        %v463 = vmax.f32 %v460, 0.0
        %464 = vst [vmem:[#allocation3] sm:$0xff] %v462
        %vm465 = vcmask 490496
        %466 = vst.msk [vmem:[#allocation3 + $0x8] sm:$0xff] %vm465, %v463
        %469 = vrot.lane.b32.xlu0 %v462, 127
        %v470 = vpop.permute.xlu0 %469
        %471 = vrot.lane.b32.xlu0 %v463, 127
        %v472 = vpop.permute.xlu0 %471
        %v473 = vsel %vm288, %v470, %v472
        %476 = vst [vmem:[#allocation3 + $0x10] sm:$0xff] %v473
        %477 = vst.msk [vmem:[#allocation3 + $0x18] sm:$0xff] %vm465, %v472
        %478 = vrot.lane.b32.xlu0 %v462, 126
        %v479 = vpop.permute.xlu0 %478
        %480 = vrot.lane.b32.xlu0 %v463, 126
        %v481 = vpop.permute.xlu0 %480
        %v482 = vsel %vm299, %v479, %v481
        %485 = vst [vmem:[#allocation3 + $0x20] sm:$0xff] %v482
        %486 = vst.msk [vmem:[#allocation3 + $0x28] sm:$0xff] %vm465, %v481
        %487 = vrot.lane.b32.xlu0 %v462, 112
        %v488 = vpop.permute.xlu0 %487
        %489 = vrot.lane.b32.xlu0 %v463, 112
        %v490 = vpop.permute.xlu0 %489
        %v491 = vsel %vm309, %v488, %v490
        %494 = vst [vmem:[#allocation3 + $0x30] sm:$0xff] %v491
        %495 = vst.msk [vmem:[#allocation3 + $0x38] sm:$0xff] %vm465, %v490
        %496 = vrot.lane.b32.xlu0 %v462, 111
        %v497 = vpop.permute.xlu0 %496
        %498 = vrot.lane.b32.xlu0 %v463, 111
        %v499 = vpop.permute.xlu0 %498
        %v500 = vsel %vm319, %v497, %v499
        %503 = vst [vmem:[#allocation3 + $0x40] sm:$0xff] %v500
        %504 = vst.msk [vmem:[#allocation3 + $0x48] sm:$0xff] %vm465, %v499
        %505 = vrot.lane.b32.xlu0 %v462, 110
        %v506 = vpop.permute.xlu0 %505
        %507 = vrot.lane.b32.xlu0 %v463, 110
        %v508 = vpop.permute.xlu0 %507
        %v509 = vsel %vm329, %v506, %v508
        %512 = vst [vmem:[#allocation3 + $0x50] sm:$0xff] %v509
        %513 = vst.msk [vmem:[#allocation3 + $0x58] sm:$0xff] %vm465, %v508
        %514 = vrot.lane.b32.xlu0 %v462, 96
        %v515 = vpop.permute.xlu0 %514
        %516 = vrot.lane.b32.xlu0 %v463, 96
        %v517 = vpop.permute.xlu0 %516
        %v518 = vsel %vm339, %v515, %v517
        %521 = vst [vmem:[#allocation3 + $0x60] sm:$0xff] %v518
        %522 = vst.msk [vmem:[#allocation3 + $0x68] sm:$0xff] %vm465, %v517
        %523 = vrot.lane.b32.xlu0 %v462, 95
        %v524 = vpop.permute.xlu0 %523
        %525 = vrot.lane.b32.xlu0 %v463, 95
        %v526 = vpop.permute.xlu0 %525
        %v527 = vsel %vm349, %v524, %v526
        %530 = vst [vmem:[#allocation3 + $0x70] sm:$0xff] %v527
        %531 = vst.msk [vmem:[#allocation3 + $0x78] sm:$0xff] %vm465, %v526
        %532 = vrot.lane.b32.xlu0 %v462, 94
        %v533 = vpop.permute.xlu0 %532
        %534 = vrot.lane.b32.xlu0 %v463, 94
        %v535 = vpop.permute.xlu0 %534
        %v536 = vsel %vm359, %v533, %v535
        %539 = vst [vmem:[#allocation3 + $0x80] sm:$0xff] %v536
        %540 = vst.msk [vmem:[#allocation3 + $0x88] sm:$0xff] %vm465, %v535
        %v541 = vld [vmem:[#allocation3] sm:$0xff]
        %v542 = vld [vmem:[#allocation3 + $0x8] sm:$0xff]
        %v543 = vld [vmem:[#allocation3 + $0x10] sm:$0xff]
        %v544 = vld [vmem:[#allocation3 + $0x18] sm:$0xff]
        %v545 = vld [vmem:[#allocation3 + $0x20] sm:$0xff]
        %v546 = vld [vmem:[#allocation3 + $0x28] sm:$0xff]
        %v547 = vld [vmem:[#allocation3 + $0x30] sm:$0xff]
        %v548 = vld [vmem:[#allocation3 + $0x38] sm:$0xff]
        %v549 = vld [vmem:[#allocation3 + $0x40] sm:$0xff]
        %v550 = vld [vmem:[#allocation3 + $0x48] sm:$0xff]
        %v551 = vld [vmem:[#allocation3 + $0x50] sm:$0xff]
        %v552 = vld [vmem:[#allocation3 + $0x58] sm:$0xff]
        %v553 = vld [vmem:[#allocation3 + $0x60] sm:$0xff]
        %v554 = vld [vmem:[#allocation3 + $0x68] sm:$0xff]
        %v555 = vld [vmem:[#allocation3 + $0x70] sm:$0xff]
        %v556 = vld [vmem:[#allocation3 + $0x78] sm:$0xff]
        %v557 = vld [vmem:[#allocation3 + $0x80] sm:$0xff]
        %v558 = vld [vmem:[#allocation3 + $0x88] sm:$0xff]
        %560 = vset.pattern.permute.xlu0 0
        %561 = vperm.xlu0 %560, %v253
        %v562 = vpop.permute.xlu0 %561
        %vm564 = vcmask 588800
        %v566 = vsel %vm564, %v251, 0
        %568 = vmatprep.subr.mxu0 %v542
        %569 = vmatpush1.msra.mxu0 %v541
        %570 = vmatprep.subr.mxu0 %v544
        %571 = vmatpush1.msra.mxu0 %v543
        %572 = vmatprep.subr.mxu0 %v546
        %573 = vmatpush1.msra.mxu0 %v545
        %574 = vmatprep.subr.mxu0 %v548
        %575 = vmatpush1.msra.mxu0 %v547
        %576 = vmatprep.subr.mxu0 %v550
        %577 = vmatpush1.msra.mxu0 %v549
        %578 = vmatprep.subr.mxu0 %v552
        %579 = vmatpush1.msra.mxu0 %v551
        %580 = vmatprep.subr.mxu0 %v554
        %581 = vmatpush1.msra.mxu0 %v553
        %582 = vmatprep.subr.mxu0 %v556
        %583 = vmatpush1.msra.mxu0 %v555
        %584 = vmatprep.subr.mxu0 %v558
        %585 = vmatpush1.msra.mxu0 %v557
        %586 = vmatprep.subr.mxu0 0.0
        %587 = vmatpush1.msra.mxu0 0.0
        %588 = vmatprep.subr.mxu0 0.0
        %589 = vmatpush1.msra.mxu0 0.0
        %590 = vmatprep.subr.mxu0 0.0
        %591 = vmatpush1.msra.mxu0 0.0
        %592 = vmatprep.subr.mxu0 0.0
        %593 = vmatpush1.msra.mxu0 0.0
        %594 = vmatprep.subr.mxu0 0.0
        %595 = vmatpush1.msra.mxu0 0.0
        %596 = vmatprep.subr.mxu0 0.0
        %597 = vmatpush1.msra.mxu0 0.0
        %598 = vmatprep.subr.mxu0 0.0
        %599 = vmatpush1.msra.mxu0 0.0
        %600 = vmatprep.subr.mxu0 0.0
        %601 = vmatpush1.msra.mxu0 0.0
        %602 = vmatprep.subr.mxu0 0.0
        %603 = vmatpush1.msra.mxu0 0.0
        %604 = vmatprep.subr.mxu0 0.0
        %605 = vmatpush1.msra.mxu0 0.0
        %606 = vmatprep.subr.mxu0 0.0
        %607 = vmatpush1.msra.mxu0 0.0
        %608 = vmatprep.subr.mxu0 0.0
        %609 = vmatpush1.msra.mxu0 0.0
        %610 = vmatprep.subr.mxu0 0.0
        %611 = vmatpush1.msra.mxu0 0.0
        %612 = vmatprep.subr.mxu0 0.0
        %613 = vmatpush1.msra.mxu0 0.0
        %614 = vmatprep.subr.mxu0 0.0
        %615 = vmatpush1.msra.mxu0 0.0
        %616 = vmatprep.subr.mxu0 0.0
        %617 = vmatpush1.msra.mxu0 0.0
        %618 = vmatprep.subr.mxu0 0.0
        %619 = vmatpush1.msra.mxu0 0.0
        %620 = vmatprep.subr.mxu0 0.0
        %621 = vmatpush1.msra.mxu0 0.0
        %622 = vmatprep.subr.mxu0 0.0
        %623 = vmatpush1.msra.mxu0 0.0
        %624 = vmatprep.subr.mxu0 0.0
        %625 = vmatpush1.msra.mxu0 0.0
        %626 = vmatprep.subr.mxu0 0.0
        %627 = vmatpush1.msra.mxu0 0.0
        %628 = vmatprep.subr.mxu0 0.0
        %629 = vmatpush1.msra.mxu0 0.0
        %630 = vmatprep.subr.mxu0 0.0
        %631 = vmatpush1.msra.mxu0 0.0
        %632 = vmatprep.mubr.f32.mxu0 0.0
        %633 = vmatmul.mubr.f32.gmra.mrb[0].mxu0 %v566
        %v634 = vpop.f32.mrb[0].mxu0
        %v635 = vadd.f32 %v562, %v634
        %v636 = vpop.f32.mrb[0].mxu0
        %v637 = vadd.f32 %v562, %v636
        %638 = vdwg.mxu0
        %v639 = vmax.f32 %v635, 0.0
        %v640 = vmax.f32 %v637, 0.0
        %643 = vrot.lane.b32.xlu0 %v639, 127
        %v644 = vpop.permute.xlu0 %643
        %645 = vrot.lane.b32.xlu0 %v640, 127
        %v646 = vpop.permute.xlu0 %645
        %v647 = vsel %vm288, %v644, %v646
        %v650 = vmax.f32 %v639, %v647
        %v651 = vmax.f32 %v640, %v646
        %652 = vrot.lane.b32.xlu0 %v639, 112
        %v653 = vpop.permute.xlu0 %652
        %654 = vrot.lane.b32.xlu0 %v640, 112
        %v655 = vpop.permute.xlu0 %654
        %v656 = vsel %vm309, %v653, %v655
        %v659 = vmax.f32 %v650, %v656
        %v660 = vmax.f32 %v651, %v655
        %661 = vrot.lane.b32.xlu0 %v639, 111
        %v662 = vpop.permute.xlu0 %661
        %663 = vrot.lane.b32.xlu0 %v640, 111
        %v664 = vpop.permute.xlu0 %663
        %v665 = vsel %vm319, %v662, %v664
        %v668 = vmax.f32 %v659, %v665
        %v669 = vmax.f32 %v660, %v664
        %vm670 = vcmask 351232
        %v672 = vsel %vm670, %v669, 0
        %vm674 = vcmask 1042432
        %v676 = vsel %vm674, %v275, 0
        %678 = vmatprep.subr.mxu0 0.0
        %679 = vmatpush1.msra.mxu0 %v254
        %680 = vmatprep.subr.mxu0 0.0
        %681 = vmatpush1.msra.mxu0 %v255
        %682 = vmatprep.subr.mxu0 0.0
        %683 = vmatpush1.msra.mxu0 %v256
        %684 = vmatprep.subr.mxu0 0.0
        %685 = vmatpush1.msra.mxu0 %v257
        %686 = vmatprep.subr.mxu0 0.0
        %687 = vmatpush1.msra.mxu0 %v258
        %688 = vmatprep.subr.mxu0 0.0
        %689 = vmatpush1.msra.mxu0 %v259
        %690 = vmatprep.subr.mxu0 0.0
        %691 = vmatpush1.msra.mxu0 %v260
        %692 = vmatprep.subr.mxu0 0.0
        %693 = vmatpush1.msra.mxu0 %v261
        %694 = vmatprep.subr.mxu0 0.0
        %695 = vmatpush1.msra.mxu0 %v262
        %696 = vmatprep.subr.mxu0 0.0
        %697 = vmatpush1.msra.mxu0 %v263
        %698 = vmatprep.subr.mxu0 0.0
        %699 = vmatpush1.msra.mxu0 %v264
        %700 = vmatprep.subr.mxu0 0.0
        %701 = vmatpush1.msra.mxu0 %v265
        %702 = vmatprep.subr.mxu0 0.0
        %703 = vmatpush1.msra.mxu0 %v266
        %704 = vmatprep.subr.mxu0 0.0
        %705 = vmatpush1.msra.mxu0 %v267
        %706 = vmatprep.subr.mxu0 0.0
        %707 = vmatpush1.msra.mxu0 %v268
        %708 = vmatprep.subr.mxu0 0.0
        %709 = vmatpush1.msra.mxu0 %v269
        %710 = vmatprep.subr.mxu0 0.0
        %711 = vmatpush1.msra.mxu0 %v270
        %712 = vmatprep.subr.mxu0 0.0
        %713 = vmatpush1.msra.mxu0 %v271
        %714 = vmatprep.subr.mxu0 0.0
        %715 = vmatpush1.msra.mxu0 %v272
        %716 = vmatprep.subr.mxu0 0.0
        %717 = vmatpush1.msra.mxu0 %v273
        %718 = vmatprep.subr.mxu0 0.0
        %719 = vmatpush1.msra.mxu0 %v274
        %720 = vmatprep.subr.mxu0 0.0
        %721 = vmatpush1.msra.mxu0 %v676
        %722 = vmatprep.subr.mxu0 0.0
        %723 = vmatpush1.msra.mxu0 0.0
        %724 = vmatprep.subr.mxu0 0.0
        %725 = vmatpush1.msra.mxu0 0.0
        %726 = vmatprep.subr.mxu0 0.0
        %727 = vmatpush1.msra.mxu0 0.0
        %728 = vmatprep.subr.mxu0 0.0
        %729 = vmatpush1.msra.mxu0 0.0
        %730 = vmatprep.subr.mxu0 0.0
        %731 = vmatpush1.msra.mxu0 0.0
        %732 = vmatprep.subr.mxu0 0.0
        %733 = vmatpush1.msra.mxu0 0.0
        %734 = vmatprep.subr.mxu0 0.0
        %735 = vmatpush1.msra.mxu0 0.0
        %736 = vmatprep.subr.mxu0 0.0
        %737 = vmatpush1.msra.mxu0 0.0
        %738 = vmatprep.subr.mxu0 0.0
        %739 = vmatpush1.msra.mxu0 0.0
        %740 = vmatprep.subr.mxu0 0.0
        %741 = vmatpush1.msra.mxu0 0.0
        %742 = vmatprep.mubr.f32.mxu0 %v672
        %743 = vmatmul.mubr.f32.gmra.mrb[0].mxu0 %v668
        %v744 = vpop.f32.mrb[0].mxu0
        %v745 = vadd.f32 0.0, %v744
        %v746 = vpop.f32.mrb[0].mxu0
        %747 = vdwg.mxu0
        %748 = vst.msk [vmem:[%s244] sm:$0xff] %vm380, %v745
        %s749 = sand.u32 %s159, 1
        %s750 = scalar_lea.sflag [#allocation5], %s749
        %s751 = sand.u32 %s159, 1
        %s752 = smul.addr %s751, 8
        %s753 = scalar_lea.vmem [#allocation4], %s752
        // Predicated region
        $region45: #{tpu_custom_call.1} parent=43 // pred_check
          %p754 = pneg %p169
        $region46: #{tpu_custom_call.1} parent=43 // pred_check_branch
          %756 = sbr.rel (%p754) target = $region48
        $region47: #{tpu_custom_call.1} parent=43 // pred_region
          %s758 = ssub.s32 128, 128
          %759 = vsyncadd %s750, %s758
          %s760 = smul.addr %s20, 128
          %s761 = scalar_lea.hbm %s6, %s760
          %s763 = sshll.u32 %s753, 4
          %s764 = int_to_ptr.vmem [resolvable:$true] %s763
          %766 = dma.vmem_to_hbm [thread:$0]  %s764, 128, %s761, %s750
        $region48: #{tpu_custom_call.1} parent=43 // pred_fallthru
          _
      $region44: #{tpu_custom_call.1} parent=5 // pred_fallthru
        _
      %p767 = scmp.le.s32.totalorder 2, %s15
      // Predicated region
      $region49: #{tpu_custom_call.1} parent=5 // pred_check
        %p768 = pneg %p767
      $region50: #{tpu_custom_call.1} parent=5 // pred_check_branch
        %770 = sbr.rel (%p768) target = $region52
      $region51: #{tpu_custom_call.1} parent=5 // pred_region
        %s771 = ssub.s32 %s15, 2
        // Predicated region
        $region53: #{tpu_custom_call.1} parent=51 // pred_check
          %p772 = pneg %p175
        $region54: #{tpu_custom_call.1} parent=51 // pred_check_branch
          %774 = sbr.rel (%p772) target = $region56
        $region55: #{tpu_custom_call.1} parent=51 // pred_region
          %s775 = sand.u32 %s160, 1
          %s776 = scalar_lea.sflag [#allocation5], %s775
          %s777 = sand.u32 %s160, 1
          %s778 = smul.addr %s777, 8
          %s779 = scalar_lea.vmem [#allocation4], %s778
          %780 = dma.done %s776, 128
        $region56: #{tpu_custom_call.1} parent=51 // pred_fallthru
          _
      $region52: #{tpu_custom_call.1} parent=5 // pred_fallthru
        _
    $region6: #{tpu_custom_call.1} parent=1 // loop_footer
      %s19 = sadd.s32 1, %s15
    $region7: #{tpu_custom_call.1} parent=1 // loop_footer_branch
      %14 = sbr.rel target = $region3
    $region8: #{tpu_custom_call.1} parent=1 // loop_exit
      _
    %781 = vsyncpa [#allocation5], 1
    %s782 = scalar_lea.sflag [#allocation5], 1
    %783 = vsyncpa %s782, 1

</llo_original>
